<compile_context>
chip_gen: v6e
topology: v6e:2x2x1
jax: 0.10.0
libtpu: 0.0.40
codegen_flags: <defaults>
</compile_context>

<pallas_src>
import jax
import jax.numpy as jnp
from jax import lax
from jax.experimental import pallas as pl
from jax.experimental.pallas import tpu as pltpu


def _fwd_kernel(x_ref, w_ref, b_ref, lbl_ref, logits_ref, losspart_ref, acc_ref):
    """Fused 1x1-conv + pixel-wise softmax-CE for one (image, spatial-tile) grid point.

    x_ref      : (C_in, T)  input tile        (class/channel on sublanes, tokens on lanes)
    w_ref      : (K, C_in)  conv weight       (resident)
    b_ref      : (K, 1)     conv bias         (resident)
    lbl_ref    : (1, T)     int32 labels tile
    logits_ref : (K, T)     logits tile out   (lane-dense store)
    losspart_ref: (1, 1)    per-image partial CE sum out
    acc_ref    : (1, T)     f32 lane-wise CE accumulator (scratch)
    """
    j = pl.program_id(1)

    @pl.when(j == 0)
    def _():
        acc_ref[...] = jnp.zeros_like(acc_ref)

    # (K, C_in) @ (C_in, T) on the MXU, f32 accumulate.
    logits = jnp.dot(w_ref[...], x_ref[...], preferred_element_type=jnp.float32)
    logits = logits + b_ref[...]                       # broadcast (K, 1) bias over lanes
    logits_ref[...] = logits.astype(logits_ref.dtype)

    # Pixel-wise softmax cross-entropy vs integer labels (class axis = sublanes).
    m = jnp.max(logits, axis=0, keepdims=True)                                  # (1, T)
    lse = m + jnp.log(jnp.sum(jnp.exp(logits - m), axis=0, keepdims=True))      # (1, T)
    cls = lax.broadcasted_iota(jnp.int32, logits.shape, 0)                      # (K, T)
    label_logit = jnp.sum(
        jnp.where(cls == lbl_ref[...], logits, 0.0), axis=0, keepdims=True)     # (1, T)
    acc_ref[...] += lse - label_logit                   # lane-wise partial sums (VPU only)

    @pl.when(j == pl.num_programs(1) - 1)
    def _():
        losspart_ref[...] = jnp.sum(acc_ref[...], keepdims=True)  # single XLU reduce / image


def teacher_student_forward(inputs_nchw, labels_nhw, params_s, *, tile_hw=8192):
    """Pallas implementation of TeacherStudentModel.forward.

    inputs_nchw : (N, C_in, H, W) float32
    labels_nhw  : (N, H, W) integer class mask
    params_s    : dict with 'w' (K, C_in) [torch 1x1 conv weight squeezed], 'b' (K,)
    Returns {'loss': scalar, 'loss_dict': {...}, 'outputs': (N, K, H, W) logits}.
    """
    n, c_in, h, w_sp = inputs_nchw.shape
    k = params_s["w"].shape[0]
    hw = h * w_sp
    m_tot = n * hw

    tile_hw = min(tile_hw, hw)
    if hw % tile_hw != 0 or tile_hw % 128 != 0:
        tile_hw = hw  # fall back to whole-image tiles for odd spatial sizes
    num_tiles = hw // tile_hw

    # Free reshapes only — no transposes, data stays in native NCHW order.
    x3 = inputs_nchw.reshape(n, c_in, hw)
    lbl3 = labels_nhw.reshape(n, 1, hw).astype(jnp.int32)
    w2 = params_s["w"]                      # (K, C_in)
    b2 = params_s["b"].reshape(k, 1)        # (K, 1)

    cost = pl.CostEstimate(
        flops=2 * m_tot * c_in * k,
        transcendentals=m_tot * (k + 1),                       # exp per class + log per pixel
        bytes_accessed=m_tot * (c_in * 4 + 4 + k * 4),         # x + labels + logits out
    )

    logits3, loss_parts = pl.pallas_call(
        _fwd_kernel,
        out_shape=(
            jax.ShapeDtypeStruct((n, k, hw), jnp.float32),     # logits, native NCHW layout
            jax.ShapeDtypeStruct((n, 1, 1), jnp.float32),      # per-image partial CE sums
        ),
        grid_spec=pltpu.PrefetchScalarGridSpec(
            num_scalar_prefetch=0,
            grid=(n, num_tiles),
            in_specs=[
                pl.BlockSpec((None, c_in, tile_hw), lambda i, j: (i, 0, j)),  # x tile
                pl.BlockSpec((k, c_in), lambda i, j: (0, 0)),                 # weight (resident)
                pl.BlockSpec((k, 1), lambda i, j: (0, 0)),                    # bias (resident)
                pl.BlockSpec((None, 1, tile_hw), lambda i, j: (i, 0, j)),     # int labels tile
            ],
            out_specs=[
                pl.BlockSpec((None, k, tile_hw), lambda i, j: (i, 0, j)),     # logits tile
                pl.BlockSpec((None, 1, 1), lambda i, j: (i, 0, 0)),           # per-image loss
            ],
            scratch_shapes=[pltpu.VMEM((1, tile_hw), jnp.float32)],
        ),
        compiler_params=pltpu.CompilerParams(
            # Batch axis is independent (per-image loss partials) -> parallel (megacore-friendly);
            # spatial-tile axis carries the CE accumulator -> arbitrary.
            dimension_semantics=("parallel", "arbitrary"),
        ),
        cost_estimate=cost,
    )(x3, w2, b2, lbl3)

    loss = jnp.sum(loss_parts) / jnp.float32(m_tot)            # tiny (N,) reduction + mean
    outputs_nchw = logits3.reshape(n, k, h, w_sp)              # free reshape back to NCHW
    loss_dict = {"CE": loss, "Total": loss}
    return {"loss": loss, "loss_dict": loss_dict, "outputs": outputs_nchw}


def _reference_forward(inputs_nchw, labels_nhw, params_s):
    """Pure-JAX reference for correctness check."""
    logits = (
        jnp.einsum("nchw,kc->nkhw", inputs_nchw, params_s["w"])
        + params_s["b"][None, :, None, None]
    )
    lse = jax.scipy.special.logsumexp(logits, axis=1)
    label_logit = jnp.take_along_axis(logits, labels_nhw[:, None, :, :], axis=1)[:, 0]
    return jnp.mean(lse - label_logit), logits


if __name__ == "__main__":
    key = jax.random.PRNGKey(0)
    k_x, k_w, k_b, k_t = jax.random.split(key, 4)

    # Small shapes consistent with a segmentation wrapper forward: NCHW inputs.
    N, C_IN, H, W = 2, 4, 16, 16
    NUM_CLASSES = 8

    inputs = jax.random.normal(k_x, (N, C_IN, H, W), dtype=jnp.float32)

    # Student 1x1 conv head parameters (torch Conv2d weight (K, C_in, 1, 1) squeezed).
    params_s = {
        "w": jax.random.normal(k_w, (NUM_CLASSES, C_IN), dtype=jnp.float32) * 0.1,
        "b": jax.random.normal(k_b, (NUM_CLASSES,), dtype=jnp.float32) * 0.01,
    }
    params_t = jax.tree_util.tree_map(lambda p: p, params_s)  # copy_parameters(model_s, model_t)
    # TODO(synk): EMA teacher update (_update_ema_variables) is training-step-only state
    # mutation; not part of forward(), so it is not lowered to a kernel here.

    # Supervised batch targets: integer class mask (criterion_sup consumes it directly now).
    labels = jax.random.randint(k_t, (N, H, W), 0, NUM_CLASSES)

    result = teacher_student_forward(inputs, labels, params_s)
    jax.block_until_ready(result["loss"])

    ref_loss, ref_logits = _reference_forward(inputs, labels, params_s)
    assert jnp.allclose(result["loss"], ref_loss, rtol=1e-5, atol=1e-5), (
        result["loss"], ref_loss
    )
    assert result["outputs"].shape == (N, NUM_CLASSES, H, W)
    assert jnp.allclose(result["outputs"], ref_logits, rtol=1e-4, atol=1e-4)

    print("KERNEL_OK")
</pallas_src>

<mosaic_0001>
module attributes {stable_mosaic.version = 11 : i64} {
  func.func @_fwd_kernel(%arg0: i32, %arg1: i32, %arg2: memref<1x4x256xf32, #tpu.memory_space<vmem>>, %arg3: memref<8x4xf32, #tpu.memory_space<vmem>>, %arg4: memref<8x1xf32, #tpu.memory_space<vmem>>, %arg5: memref<1x1x256xi32, #tpu.memory_space<vmem>>, %arg6: memref<1x8x256xf32, #tpu.memory_space<vmem>>, %arg7: memref<1x1x1xf32, #tpu.memory_space<vmem>>, %arg8: memref<1x256xf32, #tpu.memory_space<vmem>>) attributes {dimension_semantics = [#tpu.dimension_semantics<parallel>, #tpu.dimension_semantics<arbitrary>], iteration_bounds = array<i64: 2, 1>, scalar_prefetch = 0 : i64, scratch_operands = 1 : i64, tpu.core_type = #tpu.core_type<tc>, window_params = [{transform_indices = @transform_0, window_bounds = array<i64: 1, 4, 256>}, {pipeline_mode = #tpu.pipeline_mode<synchronous>, transform_indices = @transform_1, window_bounds = array<i64: 8, 4>}, {pipeline_mode = #tpu.pipeline_mode<synchronous>, transform_indices = @transform_2, window_bounds = array<i64: 8, 1>}, {transform_indices = @transform_3, window_bounds = array<i64: 1, 1, 256>}, {transform_indices = @transform_4, window_bounds = array<i64: 1, 8, 256>}, {transform_indices = @transform_5, window_bounds = array<i64: 1, 1, 1>}]} {
    %c0_i32 = arith.constant 0 : i32
    %0 = arith.cmpi eq, %arg1, %c0_i32 : i32
    %1 = arith.extui %0 : i1 to i32
    %c0_i32_0 = arith.constant 0 : i32
    %2 = arith.cmpi ne, %1, %c0_i32_0 : i32
    scf.if %2 {
      %cst_23 = arith.constant 0.000000e+00 : f32
      %38 = vector.broadcast %cst_23 : f32 to vector<1x256xf32>
      %c0_24 = arith.constant 0 : index
      %c0_25 = arith.constant 0 : index
      %39 = vector.load %arg8[%c0_24, %c0_25] : memref<1x256xf32, #tpu.memory_space<vmem>>, vector<1x256xf32>
      tpu.vector_store %arg8[%c0_24, %c0_25], %38 {strides = array<i32>} : memref<1x256xf32, #tpu.memory_space<vmem>>, vector<1x256xf32>,
    } else {
    }
    %c0 = arith.constant 0 : index
    %c0_1 = arith.constant 0 : index
    %3 = vector.load %arg3[%c0, %c0_1] : memref<8x4xf32, #tpu.memory_space<vmem>>, vector<8x4xf32>
    %c0_2 = arith.constant 0 : index
    %c0_3 = arith.constant 0 : index
    %c0_4 = arith.constant 0 : index
    %4 = vector.load %arg2[%c0_2, %c0_3, %c0_4] : memref<1x4x256xf32, #tpu.memory_space<vmem>>, vector<1x4x256xf32>
    %5 = vector.shape_cast %4 : vector<1x4x256xf32> to vector<4x256xf32>
    %cst = arith.constant dense<0.000000e+00> : vector<8x256xf32>
    %6 = tpu.matmul %3, %5, %cst {dimension_numbers = #tpu.dot_dimension_numbers<[1], [0], [0], [1], [0, 0, 1, 1], [], []>} : vector<8x4xf32>, vector<4x256xf32>, vector<8x256xf32> -> vector<8x256xf32>
    %c0_5 = arith.constant 0 : index
    %c0_6 = arith.constant 0 : index
    %7 = vector.load %arg4[%c0_5, %c0_6] : memref<8x1xf32, #tpu.memory_space<vmem>>, vector<8x1xf32>
    %8 = vector.broadcast %7 : vector<8x1xf32> to vector<8x256xf32>
    %9 = arith.addf %6, %8 : vector<8x256xf32>
    %c0_7 = arith.constant 0 : index
    %c0_8 = arith.constant 0 : index
    %c0_9 = arith.constant 0 : index
    %10 = vector.load %arg6[%c0_7, %c0_8, %c0_9] : memref<1x8x256xf32, #tpu.memory_space<vmem>>, vector<1x8x256xf32>
    %11 = vector.shape_cast %10 : vector<1x8x256xf32> to vector<8x256xf32>
    %12 = vector.shape_cast %9 : vector<8x256xf32> to vector<1x8x256xf32>
    tpu.vector_store %arg6[%c0_7, %c0_8, %c0_9], %12 {strides = array<i32>} : memref<1x8x256xf32, #tpu.memory_space<vmem>>, vector<1x8x256xf32>,
    %cst_10 = arith.constant dense<0xFF800000> : vector<256xf32>
    %13 = vector.multi_reduction <maximumf>, %9, %cst_10 [0] : vector<8x256xf32> to vector<256xf32>
    %14 = vector.shape_cast %13 : vector<256xf32> to vector<1x256xf32>
    %15 = vector.broadcast %14 : vector<1x256xf32> to vector<8x256xf32>
    %16 = arith.subf %9, %15 : vector<8x256xf32>
    %17 = math.exp %16 : vector<8x256xf32>
    %cst_11 = arith.constant dense<0.000000e+00> : vector<256xf32>
    %18 = vector.multi_reduction <add>, %17, %cst_11 [0] : vector<8x256xf32> to vector<256xf32>
    %19 = vector.shape_cast %18 : vector<256xf32> to vector<1x256xf32>
    %20 = math.log %19 : vector<1x256xf32>
    %21 = arith.addf %14, %20 : vector<1x256xf32>
    %22 = tpu.iota {dimensions = array<i32: 0>} : vector<8x256xi32>
    %c0_12 = arith.constant 0 : index
    %c0_13 = arith.constant 0 : index
    %c0_14 = arith.constant 0 : index
    %23 = vector.load %arg5[%c0_12, %c0_13, %c0_14] : memref<1x1x256xi32, #tpu.memory_space<vmem>>, vector<1x1x256xi32>
    %24 = vector.shape_cast %23 : vector<1x1x256xi32> to vector<1x256xi32>
    %25 = vector.broadcast %24 : vector<1x256xi32> to vector<8x256xi32>
    %26 = arith.cmpi eq, %22, %25 : vector<8x256xi32>
    %cst_15 = arith.constant 0.000000e+00 : f32
    %27 = vector.broadcast %cst_15 : f32 to vector<8x256xf32>
    %28 = arith.select %26, %9, %27 : vector<8x256xi1>, vector<8x256xf32>
    %cst_16 = arith.constant dense<0.000000e+00> : vector<256xf32>
    %29 = vector.multi_reduction <add>, %28, %cst_16 [0] : vector<8x256xf32> to vector<256xf32>
    %30 = vector.shape_cast %29 : vector<256xf32> to vector<1x256xf32>
    %c0_17 = arith.constant 0 : index
    %c0_18 = arith.constant 0 : index
    %31 = vector.load %arg8[%c0_17, %c0_18] : memref<1x256xf32, #tpu.memory_space<vmem>>, vector<1x256xf32>
    %32 = arith.subf %21, %30 : vector<1x256xf32>
    %33 = arith.addf %31, %32 : vector<1x256xf32>
    %c0_19 = arith.constant 0 : index
    %c0_20 = arith.constant 0 : index
    %34 = vector.load %arg8[%c0_19, %c0_20] : memref<1x256xf32, #tpu.memory_space<vmem>>, vector<1x256xf32>
    tpu.vector_store %arg8[%c0_19, %c0_20], %33 {strides = array<i32>} : memref<1x256xf32, #tpu.memory_space<vmem>>, vector<1x256xf32>,
    %c0_i32_21 = arith.constant 0 : i32
    %35 = arith.cmpi eq, %arg1, %c0_i32_21 : i32
    %36 = arith.extui %35 : i1 to i32
    %c0_i32_22 = arith.constant 0 : i32
    %37 = arith.cmpi ne, %36, %c0_i32_22 : i32
    scf.if %37 {
      %c0_23 = arith.constant 0 : index
      %c0_24 = arith.constant 0 : index
      %38 = vector.load %arg8[%c0_23, %c0_24] : memref<1x256xf32, #tpu.memory_space<vmem>>, vector<1x256xf32>
      %39 = vector.shape_cast %38 : vector<1x256xf32> to vector<1x1x256xf32>
      %cst_25 = arith.constant dense<0.000000e+00> : vector<1xf32>
      %40 = vector.multi_reduction <add>, %39, %cst_25 [1, 2] : vector<1x1x256xf32> to vector<1xf32>
      %41 = vector.shape_cast %40 : vector<1xf32> to vector<1x1x1xf32>
      %42 = vector.extract %41[0, 0, 0] : f32 from vector<1x1x1xf32>
      %43 = vector.broadcast %42 : f32 to vector<1x1xf32>
      %c0_26 = arith.constant 0 : index
      %c0_27 = arith.constant 0 : index
      %c0_28 = arith.constant 0 : index
      %44 = vector.load %arg7[%c0_26, %c0_27, %c0_28] : memref<1x1x1xf32, #tpu.memory_space<vmem>>, vector<1x1x1xf32>
      %45 = vector.shape_cast %44 : vector<1x1x1xf32> to vector<1x1xf32>
      %46 = vector.shape_cast %43 : vector<1x1xf32> to vector<1x1x1xf32>
      tpu.vector_store %arg7[%c0_26, %c0_27, %c0_28], %46 {strides = array<i32>} : memref<1x1x1xf32, #tpu.memory_space<vmem>>, vector<1x1x1xf32>,
    } else {
    }
    return
  }
  func.func @transform_0(%arg0: i32, %arg1: i32) -> (i32, i32, i32) {
    %c0_i32 = arith.constant 0 : i32
    %c0_i32_0 = arith.constant 0 : i32
    return %arg0, %c0_i32, %arg1 : i32, i32, i32
  }
  func.func @transform_1(%arg0: i32, %arg1: i32) -> (i32, i32) {
    %c0_i32 = arith.constant 0 : i32
    %c0_i32_0 = arith.constant 0 : i32
    %c0_i32_1 = arith.constant 0 : i32
    return %c0_i32, %c0_i32_0 : i32, i32
  }
  func.func @transform_2(%arg0: i32, %arg1: i32) -> (i32, i32) {
    %c0_i32 = arith.constant 0 : i32
    %c0_i32_0 = arith.constant 0 : i32
    %c0_i32_1 = arith.constant 0 : i32
    return %c0_i32, %c0_i32_0 : i32, i32
  }
  func.func @transform_3(%arg0: i32, %arg1: i32) -> (i32, i32, i32) {
    %c0_i32 = arith.constant 0 : i32
    %c0_i32_0 = arith.constant 0 : i32
    return %arg0, %c0_i32, %arg1 : i32, i32, i32
  }
  func.func @transform_4(%arg0: i32, %arg1: i32) -> (i32, i32, i32) {
    %c0_i32 = arith.constant 0 : i32
    %c0_i32_0 = arith.constant 0 : i32
    return %arg0, %c0_i32, %arg1 : i32, i32, i32
  }
  func.func @transform_5(%arg0: i32, %arg1: i32) -> (i32, i32, i32) {
    %c0_i32 = arith.constant 0 : i32
    %c0_i32_0 = arith.constant 0 : i32
    %c0_i32_1 = arith.constant 0 : i32
    return %arg0, %c0_i32, %c0_i32_0 : i32, i32, i32
  }
}

</mosaic_0001>

<llo_original>
// kernel: tpu_custom_call.1
$region0: #{tpu_custom_call.1}
  #allocation0 [shape = 'u32[]', space=smem, size = 0x4, offset = 0x4, fixed_abs, tag = 'smem constant byte address 0x4 - core index']
  #allocation1 [shape = 'u32[144,128]{1,0:T(1,128)}', space=vmem, size = 0x12000, scoped, tag = 'internal scratch']
  #allocation2 [shape = 'f32[1,256]{1,0:T(1,128)}', space=vmem, size = 0x400, scoped, tag = 'scratch operand']
  %s0 = inlined_call_operand.vmem [shape: f32[2,4,256], index: 0, kind: input, shape index: {}]
  %s1 = inlined_call_operand.vmem [shape: f32[8,4], index: 1, kind: input, shape index: {}]
  %s2 = inlined_call_operand.vmem [shape: f32[8,1], index: 2, kind: input, shape index: {}]
  %s3 = inlined_call_operand.vmem [shape: s32[2,1,256], index: 3, kind: input, shape index: {}]
  %s4 = inlined_call_operand.hbm [shape: f32[2,8,256], index: 4, kind: output, shape index: {0}]
  %s5 = inlined_call_operand.vmem [shape: f32[2,1,1], index: 5, kind: output, shape index: {1}]
  %6 = xla_tuple %s4, %s5
  %s7 = sld [smem:[#allocation0]]
  $region65: #{tpu_custom_call.1} parent=0
    _
  %s9 = ssub.s32 1, %s7
  %s10 = scalar_select 0, %s9, %s7
  $region1: #{tpu_custom_call.1} parent=0
    #allocation3 [shape = 'u8[16384]{0}', space=vmem, size = 0x4000, scoped, tag = 'output window, operand 0']
    #allocation4 [shape = 's32[2]{0}', space=sflag, size = 0x8, scoped, tag = 'scoped memory for tpu_custom_call.1']
    %11 = vsyncpa [#allocation4], 0
    %s12 = scalar_lea.sflag [#allocation4], 1
    %13 = vsyncpa %s12, 0
    loop: start=0, step=1, limit=4
    $region2: #{tpu_custom_call.1} parent=1 // loop_pre_header
      _
    $region3: #{tpu_custom_call.1} parent=1 // loop_header
      %s15 = sphi 0, %s19
      %p16 = scmp.ge.s32.totalorder %s15, 4
      %s22 = sphi 0, %s34
      %s23 = sphi 0, %s30
      %s24 = sphi 0, %s22
      %s25 = sphi 0, %s23
      %s26 = sphi 0, %s24
      %s27 = sphi 0, %s25
      %s39 = sphi 0, %s41
      %s42 = sphi 0, %s39
      %s43 = sphi 0, %s42
      %s59 = sphi 0, %s43
      %s63 = sphi 0, %s63
      %s65 = sphi 0, %s63
      %s66 = sphi 0, %s65
      %s80 = sphi 0, %s66
      %s84 = sphi 0, %s84
      %s86 = sphi 0, %s84
      %s87 = sphi 0, %s86
      %s101 = sphi 0, %s87
      %s109 = sphi 0, %s111
      %s112 = sphi 0, %s109
      %s113 = sphi 0, %s112
      %s129 = sphi 0, %s113
      %s137 = sphi 0, %s139
      %s140 = sphi 0, %s137
      %s141 = sphi 0, %s140
      %s157 = sphi 0, %s141
      %s163 = sphi 0, %s165
      %s166 = sphi 0, %s163
      %s167 = sphi 0, %s166
      %s183 = sphi 0, %s167
    $region4: #{tpu_custom_call.1} parent=1 // loop_header_branch
      %18 = sbr.rel (%p16) target = $region8
    $region5: #{tpu_custom_call.1} parent=1 // loop_body
      %s20 = ssub.s32 %s15, 1
      %s21 = ssub.s32 %s15, 2
      %s28 = sadd.s32 1, %s23
      %p29 = scmp.ge.s32.totalorder %s28, 1
      %s30 = scalar_select %p29, 0, %s28
      %s31 = sadd.s32 1, %s22
      %s32 = scalar_select %p29, %s31, %s22
      %p33 = scmp.ge.s32.totalorder %s32, 2
      %s34 = scalar_select %p33, 0, %s32
      %s35 = ssub.s32 %s22, %s34
      %s36 = ssub.s32 %s23, %s30
      %s37 = sor.u32 %s35, %s36
      %p38 = scmp.eq.s32.totalorder %s37, 0
      %s40 = sadd.s32 %s39, 1
      %s41 = scalar_select %p38, %s39, %s40
      %p44 = pneg %p38
      %p45 = scmp.eq.s32.totalorder %s15, 1
      %p46 = por %p44, %p45
      %p47 = scmp.ne.s32.totalorder %s39, %s42
      %p48 = scmp.eq.s32.totalorder %s15, 0
      %p49 = por %p47, %p48
      %p50 = scmp.ne.s32.totalorder %s39, %s42
      %p51 = scmp.eq.s32.totalorder %s20, 1
      %p52 = por %p50, %p51
      %p53 = scmp.ne.s32.totalorder %s42, %s43
      %p54 = scmp.eq.s32.totalorder %s20, 0
      %p55 = por %p53, %p54
      %p56 = scmp.ne.s32.totalorder %s42, %s43
      %p57 = scmp.eq.s32.totalorder %s21, 1
      %p58 = por %p56, %p57
      %p60 = scmp.ne.s32.totalorder %s43, %s59
      %p61 = scmp.eq.s32.totalorder %s21, 0
      %p62 = por %p60, %p61
      %s64 = sadd.s32 %s63, 1
      %p67 = scmp.eq.s32.totalorder %s15, 1
      %p68 = scmp.ne.s32.totalorder %s63, %s65
      %p69 = scmp.eq.s32.totalorder %s15, 0
      %p70 = por %p68, %p69
      %p71 = scmp.ne.s32.totalorder %s63, %s65
      %p72 = scmp.eq.s32.totalorder %s20, 1
      %p73 = por %p71, %p72
      %p74 = scmp.ne.s32.totalorder %s65, %s66
      %p75 = scmp.eq.s32.totalorder %s20, 0
      %p76 = por %p74, %p75
      %p77 = scmp.ne.s32.totalorder %s65, %s66
      %p78 = scmp.eq.s32.totalorder %s21, 1
      %p79 = por %p77, %p78
      %p81 = scmp.ne.s32.totalorder %s66, %s80
      %p82 = scmp.eq.s32.totalorder %s21, 0
      %p83 = por %p81, %p82
      %s85 = sadd.s32 %s84, 1
      %p88 = scmp.eq.s32.totalorder %s15, 1
      %p89 = scmp.ne.s32.totalorder %s84, %s86
      %p90 = scmp.eq.s32.totalorder %s15, 0
      %p91 = por %p89, %p90
      %p92 = scmp.ne.s32.totalorder %s84, %s86
      %p93 = scmp.eq.s32.totalorder %s20, 1
      %p94 = por %p92, %p93
      %p95 = scmp.ne.s32.totalorder %s86, %s87
      %p96 = scmp.eq.s32.totalorder %s20, 0
      %p97 = por %p95, %p96
      %p98 = scmp.ne.s32.totalorder %s86, %s87
      %p99 = scmp.eq.s32.totalorder %s21, 1
      %p100 = por %p98, %p99
      %p102 = scmp.ne.s32.totalorder %s87, %s101
      %p103 = scmp.eq.s32.totalorder %s21, 0
      %p104 = por %p102, %p103
      %s105 = ssub.s32 %s22, %s34
      %s106 = ssub.s32 %s23, %s30
      %s107 = sor.u32 %s105, %s106
      %p108 = scmp.eq.s32.totalorder %s107, 0
      %s110 = sadd.s32 %s109, 1
      %s111 = scalar_select %p108, %s109, %s110
      %p114 = pneg %p108
      %p115 = scmp.eq.s32.totalorder %s15, 1
      %p116 = por %p114, %p115
      %p117 = scmp.ne.s32.totalorder %s109, %s112
      %p118 = scmp.eq.s32.totalorder %s15, 0
      %p119 = por %p117, %p118
      %p120 = scmp.ne.s32.totalorder %s109, %s112
      %p121 = scmp.eq.s32.totalorder %s20, 1
      %p122 = por %p120, %p121
      %p123 = scmp.ne.s32.totalorder %s112, %s113
      %p124 = scmp.eq.s32.totalorder %s20, 0
      %p125 = por %p123, %p124
      %p126 = scmp.ne.s32.totalorder %s112, %s113
      %p127 = scmp.eq.s32.totalorder %s21, 1
      %p128 = por %p126, %p127
      %p130 = scmp.ne.s32.totalorder %s113, %s129
      %p131 = scmp.eq.s32.totalorder %s21, 0
      %p132 = por %p130, %p131
      %s133 = ssub.s32 %s22, %s34
      %s134 = ssub.s32 %s23, %s30
      %s135 = sor.u32 %s133, %s134
      %p136 = scmp.eq.s32.totalorder %s135, 0
      %s138 = sadd.s32 %s137, 1
      %s139 = scalar_select %p136, %s137, %s138
      %p142 = pneg %p136
      %p143 = scmp.eq.s32.totalorder %s15, 1
      %p144 = por %p142, %p143
      %p145 = scmp.ne.s32.totalorder %s137, %s140
      %p146 = scmp.eq.s32.totalorder %s15, 0
      %p147 = por %p145, %p146
      %p148 = scmp.ne.s32.totalorder %s137, %s140
      %p149 = scmp.eq.s32.totalorder %s20, 1
      %p150 = por %p148, %p149
      %p151 = scmp.ne.s32.totalorder %s140, %s141
      %p152 = scmp.eq.s32.totalorder %s20, 0
      %p153 = por %p151, %p152
      %p154 = scmp.ne.s32.totalorder %s140, %s141
      %p155 = scmp.eq.s32.totalorder %s21, 1
      %p156 = por %p154, %p155
      %p158 = scmp.ne.s32.totalorder %s141, %s157
      %p159 = scmp.eq.s32.totalorder %s21, 0
      %p160 = por %p158, %p159
      %s161 = ssub.s32 %s22, %s34
      %p162 = scmp.eq.s32.totalorder %s161, 0
      %s164 = sadd.s32 %s163, 1
      %s165 = scalar_select %p162, %s163, %s164
      %p168 = pneg %p162
      %p169 = scmp.eq.s32.totalorder %s15, 1
      %p170 = por %p168, %p169
      %p171 = scmp.ne.s32.totalorder %s163, %s166
      %p172 = scmp.eq.s32.totalorder %s15, 0
      %p173 = por %p171, %p172
      %p174 = scmp.ne.s32.totalorder %s163, %s166
      %p175 = scmp.eq.s32.totalorder %s20, 1
      %p176 = por %p174, %p175
      %p177 = scmp.ne.s32.totalorder %s166, %s167
      %p178 = scmp.eq.s32.totalorder %s20, 0
      %p179 = por %p177, %p178
      %p180 = scmp.ne.s32.totalorder %s166, %s167
      %p181 = scmp.eq.s32.totalorder %s21, 1
      %p182 = por %p180, %p181
      %p184 = scmp.ne.s32.totalorder %s167, %s183
      %p185 = scmp.eq.s32.totalorder %s21, 0
      %p186 = por %p184, %p185
      %p187 = scmp.le.s32.totalorder 1, %s15
      %p188 = scmp.lt.s32.totalorder %s15, 3
      %p189 = pnand %p187, %p188
      %p190 = pneg %p189
      // Predicated region
      $region9: #{tpu_custom_call.1} parent=5 // pred_check
        _
      $region10: #{tpu_custom_call.1} parent=5 // pred_check_branch
        %192 = sbr.rel (%p189) target = $region12
      $region11: #{tpu_custom_call.1} parent=5 // pred_region
        %s193 = ssub.s32 %s15, 1
        // Predicated region
        $region13: #{tpu_custom_call.1} parent=11 // pred_check
          %p194 = pneg %p76
        $region14: #{tpu_custom_call.1} parent=11 // pred_check_branch
          %196 = sbr.rel (%p194) target = $region16
        $region15: #{tpu_custom_call.1} parent=11 // pred_region
          _
        $region16: #{tpu_custom_call.1} parent=11 // pred_fallthru
          _
        // Predicated region
        $region17: #{tpu_custom_call.1} parent=11 // pred_check
          %p197 = pneg %p97
        $region18: #{tpu_custom_call.1} parent=11 // pred_check_branch
          %199 = sbr.rel (%p197) target = $region20
        $region19: #{tpu_custom_call.1} parent=11 // pred_region
          _
        $region20: #{tpu_custom_call.1} parent=11 // pred_fallthru
          _
      $region12: #{tpu_custom_call.1} parent=5 // pred_fallthru
        _
      %p200 = scmp.lt.s32.totalorder %s15, 2
      // Predicated region
      $region21: #{tpu_custom_call.1} parent=5 // pred_check
        %p201 = pneg %p200
      $region22: #{tpu_custom_call.1} parent=5 // pred_check_branch
        %203 = sbr.rel (%p201) target = $region24
      $region23: #{tpu_custom_call.1} parent=5 // pred_region
        // Predicated region
        $region25: #{tpu_custom_call.1} parent=23 // pred_check
          %p204 = pneg %p49
        $region26: #{tpu_custom_call.1} parent=23 // pred_check_branch
          %206 = sbr.rel (%p204) target = $region28
        $region27: #{tpu_custom_call.1} parent=23 // pred_region
          %s207 = smul.u32 2, %s23
          %p208 = scmp.lt.s32.totalorder %s22, 1
          %s209 = scalar_select %p208, %s22, 1
          %p210 = scmp.lt.s32.totalorder %s207, 1
          %s211 = scalar_select %p210, %s207, 1
          %s212 = smul.addr %s209, 2
          %s213 = sadd.s32 %s211, %s212
          %s214 = smul.addr %s213, 4
          %s215 = scalar_lea.vmem %s0, %s214
          %s216 = smul.u32 2, %s23
        $region28: #{tpu_custom_call.1} parent=23 // pred_fallthru
          _
        // Predicated region
        $region29: #{tpu_custom_call.1} parent=23 // pred_check
          %p217 = pneg %p119
        $region30: #{tpu_custom_call.1} parent=23 // pred_check_branch
          %219 = sbr.rel (%p217) target = $region32
        $region31: #{tpu_custom_call.1} parent=23 // pred_region
          %s220 = smul.u32 2, %s23
          %p221 = scmp.lt.s32.totalorder %s22, 1
          %s222 = scalar_select %p221, %s22, 1
          %p223 = scmp.lt.s32.totalorder %s220, 1
          %s224 = scalar_select %p223, %s220, 1
          %s225 = smul.addr %s222, 2
          %s226 = sadd.s32 %s224, %s225
          %s227 = scalar_lea.vmem %s3, %s226
          %s228 = smul.u32 2, %s23
        $region32: #{tpu_custom_call.1} parent=23 // pred_fallthru
          _
      $region24: #{tpu_custom_call.1} parent=5 // pred_fallthru
        _
      %p229 = scmp.le.s32.totalorder 1, %s15
      %p230 = scmp.lt.s32.totalorder %s15, 3
      %p231 = pnand %p229, %p230
      %p232 = pneg %p231
      // Predicated region
      $region33: #{tpu_custom_call.1} parent=5 // pred_check
        _
      $region34: #{tpu_custom_call.1} parent=5 // pred_check_branch
        %234 = sbr.rel (%p231) target = $region36
      $region35: #{tpu_custom_call.1} parent=5 // pred_region
        %s235 = ssub.s32 %s15, 1
        %s236 = smul.u32 2, %s25
        %p237 = scmp.lt.s32.totalorder %s24, 1
        %s238 = scalar_select %p237, %s24, 1
        %p239 = scmp.lt.s32.totalorder %s236, 1
        %s240 = scalar_select %p239, %s236, 1
        %s241 = smul.addr %s238, 2
        %s242 = sadd.s32 %s240, %s241
        %s243 = smul.addr %s242, 4
        %s244 = scalar_lea.vmem %s0, %s243
        %p245 = pneg %p55
        %p246 = pneg %p52
        %p247 = pneg %p76
        %p248 = pneg %p73
        %p249 = pneg %p97
        %p250 = pneg %p94
        %s251 = smul.u32 2, %s25
        %p252 = scmp.lt.s32.totalorder %s24, 1
        %s253 = scalar_select %p252, %s24, 1
        %p254 = scmp.lt.s32.totalorder %s251, 1
        %s255 = scalar_select %p254, %s251, 1
        %s256 = smul.addr %s253, 2
        %s257 = sadd.s32 %s255, %s256
        %s258 = scalar_lea.vmem %s3, %s257
        %p259 = pneg %p125
        %p260 = pneg %p122
        %p261 = pneg %p153
        %p262 = pneg %p150
        %s263 = sand.u32 %s140, 1
        %s264 = scalar_lea.sflag [#allocation4], %s263
        %s265 = sand.u32 %s140, 1
        %s266 = smul.addr %s265, 16
        %s267 = scalar_lea.vmem [#allocation3], %s266
        %p268 = pneg %p179
        %p269 = pneg %p176
        %p270 = scmp.lt.s32.totalorder %s24, 1
        %s271 = scalar_select %p270, %s24, 1
        %s272 = scalar_lea.vmem %s5, %s271
        %s273 = smul.u32 2, %s25
        %p274 = scmp.lt.s32.totalorder %s24, 1
        %s275 = scalar_select %p274, %s24, 1
        %p276 = scmp.lt.s32.totalorder %s273, 1
        %s277 = scalar_select %p276, %s273, 1
        %s278 = smul.addr %s275, 2
        %s279 = sadd.s32 %s277, %s278
        %s280 = smul.addr %s279, 4
        %s281 = scalar_lea.vmem %s0, %s280
        %s282 = smul.u32 2, %s25
        %s283 = smul.u32 2, %s25
        %p284 = scmp.lt.s32.totalorder %s24, 1
        %s285 = scalar_select %p284, %s24, 1
        %p286 = scmp.lt.s32.totalorder %s283, 1
        %s287 = scalar_select %p286, %s283, 1
        %s288 = smul.addr %s285, 2
        %s289 = sadd.s32 %s287, %s288
        %s290 = scalar_lea.vmem %s3, %s289
        %s291 = smul.u32 2, %s25
        %s292 = smul.u32 2, %s25
        %p293 = scmp.lt.s32.totalorder %s24, 1
        %s294 = scalar_select %p293, %s24, 1
        %s295 = scalar_lea.vmem %s5, %s294
        %p296 = scmp.eq.s32.totalorder %s25, 0
        // Predicated region
        $region37: #{tpu_custom_call.1} parent=35 // pred_check
          %p297 = pneg %p296
        $region38: #{tpu_custom_call.1} parent=35 // pred_check_branch
          %299 = sbr.rel (%p297) target = $region40
        $region39: #{tpu_custom_call.1} parent=35 // pred_region
          %v300 = vlaneseq
          %vm301 = vcmp.ge.s32.totalorder %v300, 0
          %vm302 = vcmp.lt.s32.totalorder %v300, 256
          %vm303 = vmand %vm301, %vm302
          %304 = vst.msk [vmem:[#allocation2] sm:$0x3] %vm303, 0.0
        $region40: #{tpu_custom_call.1} parent=35 // pred_fallthru
          _
        %v305 = vld [vmem:[%s1] sm:$0xff]
        %v306 = vld [vmem:[%s281] sm:$0xff]
        %v307 = vld [vmem:[%s2] sm:$0xff]
        %309 = vset.pattern.permute.xlu0 0
        %310 = vperm.xlu0 %309, %v307
        %v311 = vpop.permute.xlu0 %310
        %v314 = vcombine.high %v306, %v306
        %vm315 = vcmask 31744
        %v317 = vsel %vm315, %v305, 0
        %vm319 = vcmask 1043456
        %v320 = vsel %vm319, %v306, 0
        %v322 = vsel %vm319, %v314, 0
        %324 = vmatprep.subr.mxu0 0.0
        %325 = vmatpush1.msra.mxu0 0.0
        %326 = vmatprep.subr.mxu0 0.0
        %327 = vmatpush1.msra.mxu0 0.0
        %328 = vmatprep.subr.mxu0 0.0
        %329 = vmatpush1.msra.mxu0 0.0
        %330 = vmatprep.subr.mxu0 0.0
        %331 = vmatpush1.msra.mxu0 0.0
        %332 = vmatprep.subr.mxu0 0.0
        %333 = vmatpush1.msra.mxu0 0.0
        %334 = vmatprep.subr.mxu0 0.0
        %335 = vmatpush1.msra.mxu0 0.0
        %336 = vmatprep.subr.mxu0 0.0
        %337 = vmatpush1.msra.mxu0 0.0
        %338 = vmatprep.subr.mxu0 0.0
        %339 = vmatpush1.msra.mxu0 0.0
        %340 = vmatprep.subr.mxu0 0.0
        %341 = vmatpush1.msra.mxu0 0.0
        %342 = vmatprep.subr.mxu0 0.0
        %343 = vmatpush1.msra.mxu0 0.0
        %344 = vmatprep.subr.mxu0 0.0
        %345 = vmatpush1.msra.mxu0 0.0
        %346 = vmatprep.subr.mxu0 0.0
        %347 = vmatpush1.msra.mxu0 0.0
        %348 = vmatprep.subr.mxu0 0.0
        %349 = vmatpush1.msra.mxu0 0.0
        %350 = vmatprep.subr.mxu0 0.0
        %351 = vmatpush1.msra.mxu0 0.0
        %352 = vmatprep.subr.mxu0 0.0
        %353 = vmatpush1.msra.mxu0 0.0
        %354 = vmatprep.subr.mxu0 %v322
        %355 = vmatpush1.msra.mxu0 %v320
        %356 = vmatprep.subr.mxu0 0.0
        %357 = vmatpush2.msra.mxu0 0.0
        %358 = vmatprep.subr.mxu0 0.0
        %359 = vmatpush2.msra.mxu0 0.0
        %360 = vmatprep.subr.mxu0 0.0
        %361 = vmatpush2.msra.mxu0 0.0
        %362 = vmatprep.subr.mxu0 0.0
        %363 = vmatpush2.msra.mxu0 0.0
        %364 = vmatprep.subr.mxu0 0.0
        %365 = vmatpush2.msra.mxu0 0.0
        %366 = vmatprep.subr.mxu0 0.0
        %367 = vmatpush2.msra.mxu0 0.0
        %368 = vmatprep.subr.mxu0 0.0
        %369 = vmatpush2.msra.mxu0 0.0
        %370 = vmatprep.subr.mxu0 0.0
        %371 = vmatpush2.msra.mxu0 0.0
        %372 = vmatprep.subr.mxu0 0.0
        %373 = vmatpush2.msra.mxu0 0.0
        %374 = vmatprep.subr.mxu0 0.0
        %375 = vmatpush2.msra.mxu0 0.0
        %376 = vmatprep.subr.mxu0 0.0
        %377 = vmatpush2.msra.mxu0 0.0
        %378 = vmatprep.subr.mxu0 0.0
        %379 = vmatpush2.msra.mxu0 0.0
        %380 = vmatprep.subr.mxu0 0.0
        %381 = vmatpush2.msra.mxu0 0.0
        %382 = vmatprep.subr.mxu0 0.0
        %383 = vmatpush2.msra.mxu0 0.0
        %384 = vmatprep.subr.mxu0 0.0
        %385 = vmatpush2.msra.mxu0 0.0
        %386 = vmatprep.subr.mxu0 0.0
        %387 = vmatpush2.msra.mxu0 0.0
        %388 = vmatprep.mubr.f32.mxu0 0.0
        %389 = vmatmul.mubr.f32.gmra.mxu0 %v317
        %v390 = vpop.f32.mrf.mxu0
        %v391 = vadd.f32 %v311, %v390
        %v392 = vpop.f32.mrf.mxu0
        %v393 = vadd.f32 %v311, %v392
        %394 = vdwg.mxu0
        %395 = vst [vmem:[%s267] sm:$0xff] %v391
        %396 = vst [vmem:[%s267 + $0x8] sm:$0xff] %v393
        %v397 = vrot.slane %v391, 4
        %v398 = vmax.f32 %v391, %v397
        %v399 = vrot.slane %v398, 2
        %v400 = vmax.f32 %v398, %v399
        %v401 = vrot.slane %v400, 1
        %v402 = vmax.f32 %v400, %v401
        %v403 = vrot.slane %v393, 4
        %v404 = vmax.f32 %v393, %v403
        %v405 = vrot.slane %v404, 2
        %v406 = vmax.f32 %v404, %v405
        %v407 = vrot.slane %v406, 1
        %v408 = vmax.f32 %v406, %v407
        %v409 = vsub.f32 %v391, %v402
        %v410 = vsub.f32 %v393, %v408
        %v411 = vmul.f32 %v409, 1.442695
        %v412 = vpow.pop %v411
        %v413 = vmul.f32 %v410, 1.442695
        %v414 = vpow.pop %v413
        %v415 = vrot.slane %v412, 4
        %v416 = vadd.f32 %v412, %v415
        %v417 = vrot.slane %v416, 2
        %v418 = vadd.f32 %v416, %v417
        %v419 = vrot.slane %v418, 1
        %v420 = vadd.f32 %v418, %v419
        %v421 = vrot.slane %v414, 4
        %v422 = vadd.f32 %v414, %v421
        %v423 = vrot.slane %v422, 2
        %v424 = vadd.f32 %v422, %v423
        %v425 = vrot.slane %v424, 1
        %v426 = vadd.f32 %v424, %v425
        %v427 = vlog2.pop %v420
        %v428 = vmul.f32 %v427, 0.6931472
        %v429 = vlog2.pop %v426
        %v430 = vmul.f32 %v429, 0.6931472
        %v431 = vadd.f32 %v402, %v428
        %v432 = vadd.f32 %v408, %v430
        %v433 = vlaneseq
        %v434 = vshrl.u32 %v433, 7
        %v435 = vld [vmem:[%s290] sm:$0x3]
        %v436 = vlaneseq
        %v437 = vshrl.u32 %v436, 7
        %v438 = vsub.s32 0, %v437
        %v439 = vrot.slane %v435, %v438
        %v440 = vlaneseq
        %v441 = vshrl.u32 %v440, 7
        %v442 = vsub.s32 1, %v441
        %v443 = vrot.slane %v435, %v442
        %vm444 = vcmp.eq.s32.totalorder %v434, %v439
        %vm445 = vcmp.eq.s32.totalorder %v434, %v443
        %v446 = vsel %vm444, %v391, 0.0
        %v447 = vsel %vm445, %v393, 0.0
        %v448 = vrot.slane %v446, 4
        %v449 = vadd.f32 %v446, %v448
        %v450 = vrot.slane %v449, 2
        %v451 = vadd.f32 %v449, %v450
        %v452 = vrot.slane %v451, 1
        %v453 = vadd.f32 %v451, %v452
        %v454 = vrot.slane %v447, 4
        %v455 = vadd.f32 %v447, %v454
        %v456 = vrot.slane %v455, 2
        %v457 = vadd.f32 %v455, %v456
        %v458 = vrot.slane %v457, 1
        %v459 = vadd.f32 %v457, %v458
        %v460 = vld [vmem:[#allocation2] sm:$0x3]
        %v461 = vsub.f32 %v431, %v453
        %v462 = vsub.f32 %v432, %v459
        %v465 = vcombine.low %v461, %v462
        %v467 = vunpack.c.l.s4 1966171168
        %v468 = vunpack.c.0.s8 %v467
        %v469 = vlaneseq
        %v470 = vshrl.u32 %v469, 7
        %v471 = vsub.s32 %v468, %v470
        %v472 = vrot.slane %v465, %v471
        %v474 = vunpack.c.l.s4 1966171168
        %v475 = vunpack.c.0.s8 %v474
        %v476 = vlaneseq
        %v477 = vshrl.u32 %v476, 7
        %v478 = vsub.s32 %v475, %v477
        %v479 = vrot.slane %v472, %v478
        %v481 = vadd.f32 %v460, %v479
        %v482 = vlaneseq
        %vm483 = vcmp.ge.s32.totalorder %v482, 0
        %vm484 = vcmp.lt.s32.totalorder %v482, 256
        %vm485 = vmand %vm483, %vm484
        %486 = vst.msk [vmem:[#allocation2] sm:$0x3] %vm485, %v481
        // Predicated region
        $region41: #{tpu_custom_call.1} parent=35 // pred_check
          %p487 = pneg %p296
        $region42: #{tpu_custom_call.1} parent=35 // pred_check_branch
          %489 = sbr.rel (%p487) target = $region44
        $region43: #{tpu_custom_call.1} parent=35 // pred_region
          %v490 = vld [vmem:[#allocation2] sm:$0x3]
          %v492 = vlaneseq
          %v493 = vshrl.u32 %v492, 7
          %v494 = vsub.s32 0, %v493
          %v495 = vrot.slane %v490, %v494
          %v496 = vlaneseq
          %v497 = vshrl.u32 %v496, 7
          %v498 = vsub.s32 1, %v497
          %v499 = vrot.slane %v490, %v498
          %vm502 = vcmask 1040384
          %v503 = vsel %vm502, %v495, 0.0
          %v504 = vsel %vm502, %v499, 0.0
          %v505 = vadd.f32 %v503, %v504
          %506 = vadd.xlane.f32.xlu0 %v505
          %v507 = vpop.xlane.xlu0 %506
          %v508 = vrot.slane %v507, 4
          %v509 = vadd.f32 %v507, %v508
          %v510 = vrot.slane %v509, 2
          %v511 = vadd.f32 %v509, %v510
          %v512 = vrot.slane %v511, 1
          %v513 = vadd.f32 %v511, %v512
          %s514 = vtos %v513
          %v515 = vstv %s514
          %vm516 = vcmask 0
          %517 = vst.msk [vmem:[%s295] sm:$0x1] %vm516, %v515
        $region44: #{tpu_custom_call.1} parent=35 // pred_fallthru
          _
        %s518 = sand.u32 %s140, 1
        %s519 = scalar_lea.sflag [#allocation4], %s518
        %s520 = sand.u32 %s140, 1
        %s521 = smul.addr %s520, 16
        %s522 = scalar_lea.vmem [#allocation3], %s521
        %p523 = scmp.lt.s32.totalorder %s24, 1
        %s524 = scalar_select %p523, %s24, 1
        %s525 = scalar_lea.vmem %s5, %s524
        // Predicated region
        $region45: #{tpu_custom_call.1} parent=35 // pred_check
          %p526 = pneg %p150
        $region46: #{tpu_custom_call.1} parent=35 // pred_check_branch
          %528 = sbr.rel (%p526) target = $region48
        $region47: #{tpu_custom_call.1} parent=35 // pred_region
          %s529 = smul.u32 2, %s25
          %s531 = ssub.s32 256, 256
          %532 = vsyncadd %s519, %s531
          %s533 = smul.addr %s24, 2
          %s534 = sadd.s32 %s529, %s533
          %s535 = smul.addr %s534, 128
          %s536 = scalar_lea.hbm %s4, %s535
          %s538 = sshll.u32 %s522, 4
          %s539 = int_to_ptr.vmem [resolvable:$true] %s538
          %541 = dma.vmem_to_hbm [thread:$0]  %s539, 256, %s536, %s519
        $region48: #{tpu_custom_call.1} parent=35 // pred_fallthru
          _
        // Predicated region
        $region49: #{tpu_custom_call.1} parent=35 // pred_check
          %p542 = pneg %p176
        $region50: #{tpu_custom_call.1} parent=35 // pred_check_branch
          %544 = sbr.rel (%p542) target = $region52
        $region51: #{tpu_custom_call.1} parent=35 // pred_region
          _
        $region52: #{tpu_custom_call.1} parent=35 // pred_fallthru
          _
      $region36: #{tpu_custom_call.1} parent=5 // pred_fallthru
        _
      %p545 = scmp.le.s32.totalorder 2, %s15
      // Predicated region
      $region53: #{tpu_custom_call.1} parent=5 // pred_check
        %p546 = pneg %p545
      $region54: #{tpu_custom_call.1} parent=5 // pred_check_branch
        %548 = sbr.rel (%p546) target = $region56
      $region55: #{tpu_custom_call.1} parent=5 // pred_region
        %s549 = ssub.s32 %s15, 2
        // Predicated region
        $region57: #{tpu_custom_call.1} parent=55 // pred_check
          %p550 = pneg %p156
        $region58: #{tpu_custom_call.1} parent=55 // pred_check_branch
          %552 = sbr.rel (%p550) target = $region60
        $region59: #{tpu_custom_call.1} parent=55 // pred_region
          %s553 = sand.u32 %s141, 1
          %s554 = scalar_lea.sflag [#allocation4], %s553
          %s555 = sand.u32 %s141, 1
          %s556 = smul.addr %s555, 16
          %s557 = scalar_lea.vmem [#allocation3], %s556
          %558 = dma.done %s554, 256
        $region60: #{tpu_custom_call.1} parent=55 // pred_fallthru
          _
        // Predicated region
        $region61: #{tpu_custom_call.1} parent=55 // pred_check
          %p559 = pneg %p182
        $region62: #{tpu_custom_call.1} parent=55 // pred_check_branch
          %561 = sbr.rel (%p559) target = $region64
        $region63: #{tpu_custom_call.1} parent=55 // pred_region
          %p562 = scmp.lt.s32.totalorder %s26, 1
          %s563 = scalar_select %p562, %s26, 1
          %s564 = scalar_lea.vmem %s5, %s563
        $region64: #{tpu_custom_call.1} parent=55 // pred_fallthru
          _
      $region56: #{tpu_custom_call.1} parent=5 // pred_fallthru
        _
    $region6: #{tpu_custom_call.1} parent=1 // loop_footer
      %s19 = sadd.s32 1, %s15
    $region7: #{tpu_custom_call.1} parent=1 // loop_footer_branch
      %14 = sbr.rel target = $region3
    $region8: #{tpu_custom_call.1} parent=1 // loop_exit
      _
    %565 = vsyncpa [#allocation4], 1
    %s566 = scalar_lea.sflag [#allocation4], 1
    %567 = vsyncpa %s566, 1

</llo_original>
